<compile_context>
chip_gen: v7x
topology: tpu7x:2x2x1
jax: 0.10.0
libtpu: 0.0.40
codegen_flags: <defaults>
</compile_context>

<pallas_src>
import functools

import jax
import jax.numpy as jnp
from jax.experimental import pallas as pl
from jax.experimental.pallas import tpu as pltpu


def _feature_projector_kernel(x_ref, w_ref, b_ref, o_ref, *,
                              eps, K, cin_pad, t_out, inv_count):
    # x_ref: (bb, Cin, T)          un-padded input block (NCT layout)
    # w_ref: (Cout, K*Cin_pad)     affine-folded, lane-dense conv weight
    # b_ref: (Cout, 1)             affine-folded bias, f32
    # o_ref: (bb, Cout, T_out)     exact (un-padded) output block
    bb, cin, t_in = x_ref.shape
    w = w_ref[...]                             # MXU operand dtype (== input dtype)
    b = b_ref[...].astype(jnp.float32)         # (Cout, 1)

    # --- GroupNorm(num_groups=1): per-sample mean/var over (Cin, T), two-pass f32.
    xb = x_ref[...].astype(jnp.float32)        # (bb, Cin, T)
    s = jnp.sum(jnp.sum(xb, axis=2, keepdims=True), axis=1, keepdims=True)
    mean = s * inv_count                       # (bb, 1, 1)
    xc = xb - mean
    ss = jnp.sum(jnp.sum(xc * xc, axis=2, keepdims=True), axis=1, keepdims=True)
    var = ss * inv_count
    xn = xc * jax.lax.rsqrt(var + eps)         # affine folded into w/b

    # --- pad channels to a sublane multiple so im2col segments are tile-aligned.
    if cin_pad > cin:
        xn = jnp.concatenate(
            [xn, jnp.zeros((bb, cin_pad - cin, t_in), jnp.float32)], axis=1)

    # --- batched im2col: (K*Cin_pad, bb*T); zero-fill tails only touch columns
    #     beyond T_out, which are never stored.
    cols = []
    for bi in range(bb):
        xs = xn[bi]                            # (Cin_pad, T), static leading index
        segs = [xs]
        for k in range(1, K):
            segs.append(jnp.concatenate(
                [xs[:, k:], jnp.zeros((cin_pad, k), jnp.float32)], axis=1))
        cols.append(jnp.concatenate(segs, axis=0))          # (K*Cin_pad, T)
    xcol = cols[0] if bb == 1 else jnp.concatenate(cols, axis=1)  # (K*Cin_pad, bb*T)

    # --- one MXU matmul per grid step, f32 accumulate; bias added once.
    acc = jnp.dot(w, xcol.astype(w.dtype), preferred_element_type=jnp.float32) + b

    # --- per-sample stores of the first T_out columns of each sample's lane slab.
    for bi in range(bb):
        o_ref[bi] = acc[:, bi * t_in: bi * t_in + t_out].astype(o_ref.dtype)


def feature_projector(x, gamma, beta, weight, bias, *, eps=1e-8, block_b=8):
    """x: (B, Cin, T); gamma/beta: (Cin,); weight: (Cout, Cin, K); bias: (Cout,) or None."""
    B, Cin, T = x.shape
    Cout, Cin_w, K = weight.shape
    assert Cin_w == Cin
    T_out = T - K + 1
    assert T_out >= 1

    # --- Fold the GroupNorm affine into the conv weight & bias (once, outside the grid).
    w32 = weight.astype(jnp.float32)
    w_eff = w32 * gamma.astype(jnp.float32)[None, :, None]              # (Cout, Cin, K)
    b_base = (bias.astype(jnp.float32) if bias is not None
              else jnp.zeros((Cout,), jnp.float32))
    b_eff = b_base + jnp.einsum("ock,c->o", w32, beta.astype(jnp.float32))

    # --- Sublane-aligned channel dim; padded channels carry zero weights.
    Cin_pad = ((Cin + 7) // 8) * 8
    if Cin_pad > Cin:
        w_eff = jnp.pad(w_eff, ((0, 0), (0, Cin_pad - Cin), (0, 0)))
    # Lane-dense weight: row index = k*Cin_pad + c  -> (Cout, K*Cin_pad).
    w_flat = jnp.transpose(w_eff, (0, 2, 1)).reshape(Cout, K * Cin_pad).astype(x.dtype)
    b_col = b_eff.reshape(Cout, 1)                                       # f32

    # --- Samples per grid step: largest divisor of B under the cap, with the cap
    #     chosen so the grid has >= 2 steps when B >= 2 (v7x megacore sharding).
    bb_cap = max(1, min(block_b, B // 2 if B >= 2 else 1))
    bb = bb_cap
    while B % bb:
        bb -= 1
    # TODO(synk): ragged / zero-padded final block so prime B still gets bb > 1.

    # --- Generation-aware VMEM budget (v7x has 64 MiB/TC, v5e/v6e 128 MiB).
    try:
        vmem_cap = pltpu.get_tpu_info().vmem_capacity_bytes
    except Exception:
        vmem_cap = 128 * 1024 * 1024
    vmem_limit = max(16 << 20, min(vmem_cap // 2, 64 << 20))

    kernel = functools.partial(
        _feature_projector_kernel,
        eps=float(eps), K=K, cin_pad=Cin_pad, t_out=T_out,
        inv_count=1.0 / float(Cin * T))

    return pl.pallas_call(
        kernel,
        out_shape=jax.ShapeDtypeStruct((B, Cout, T_out), x.dtype),
        grid_spec=pltpu.PrefetchScalarGridSpec(
            num_scalar_prefetch=0,
            grid=(B // bb,),
            in_specs=[
                pl.BlockSpec((bb, Cin, T), lambda b: (b, 0, 0)),         # x (un-padded)
                pl.BlockSpec((Cout, K * Cin_pad), lambda b: (0, 0)),     # folded weight
                pl.BlockSpec((Cout, 1), lambda b: (0, 0)),               # folded bias
            ],
            out_specs=pl.BlockSpec((bb, Cout, T_out), lambda b: (b, 0, 0)),
        ),
        compiler_params=pltpu.CompilerParams(
            dimension_semantics=("parallel",),
            vmem_limit_bytes=vmem_limit),
    )(x, w_flat, b_col)


def _reference(x, gamma, beta, weight, bias, eps=1e-8):
    # Pure-JAX reference mirroring torch GroupNorm(1) + Conv1d.
    mean = jnp.mean(x, axis=(1, 2), keepdims=True)
    var = jnp.mean((x - mean) ** 2, axis=(1, 2), keepdims=True)
    xn = (x - mean) / jnp.sqrt(var + eps)
    xn = xn * gamma[None, :, None] + beta[None, :, None]
    y = jax.lax.conv_general_dilated(
        xn, weight, window_strides=(1,), padding="VALID",
        dimension_numbers=("NCH", "OIH", "NCH"))
    if bias is not None:
        y = y + bias[None, :, None]
    return y


if __name__ == "__main__":
    # Module config (synthetic, deterministic): num_channels == in_channels.
    B, Cin, T = 2, 4, 16
    Cout, K = 8, 3
    eps = 1e-8

    key = jax.random.PRNGKey(0)
    kx, kg, kb, kw, kbi = jax.random.split(key, 5)

    x = jax.random.normal(kx, (B, Cin, T), dtype=jnp.float32)
    gamma = 1.0 + 0.1 * jax.random.normal(kg, (Cin,), dtype=jnp.float32)
    beta = 0.1 * jax.random.normal(kb, (Cin,), dtype=jnp.float32)
    weight = 0.2 * jax.random.normal(kw, (Cout, Cin, K), dtype=jnp.float32)
    bias = 0.1 * jax.random.normal(kbi, (Cout,), dtype=jnp.float32)

    out = feature_projector(x, gamma, beta, weight, bias, eps=eps)
    out = jax.block_until_ready(out)

    ref = _reference(x, gamma, beta, weight, bias, eps=eps)
    assert out.shape == (B, Cout, T - K + 1), out.shape
    assert jnp.allclose(out, ref, atol=1e-4, rtol=1e-4), float(jnp.max(jnp.abs(out - ref)))

    print("KERNEL_OK")
</pallas_src>

<mosaic_0001>
module attributes {stable_mosaic.version = 11 : i64} {
  func.func @_feature_projector_kernel(%arg0: i32, %arg1: memref<1x4x16xf32, #tpu.memory_space<vmem>>, %arg2: memref<8x24xf32, #tpu.memory_space<vmem>>, %arg3: memref<8x1xf32, #tpu.memory_space<vmem>>, %arg4: memref<1x8x14xf32, #tpu.memory_space<vmem>>) attributes {dimension_semantics = [#tpu.dimension_semantics<parallel>], iteration_bounds = array<i64: 2>, scalar_prefetch = 0 : i64, scratch_operands = 0 : i64, tpu.core_type = #tpu.core_type<tc>, window_params = [{transform_indices = @transform_0, window_bounds = array<i64: 1, 4, 16>}, {pipeline_mode = #tpu.pipeline_mode<synchronous>, transform_indices = @transform_1, window_bounds = array<i64: 8, 24>}, {pipeline_mode = #tpu.pipeline_mode<synchronous>, transform_indices = @transform_2, window_bounds = array<i64: 8, 1>}, {transform_indices = @transform_3, window_bounds = array<i64: 1, 8, 14>}]} {
    %c0 = arith.constant 0 : index
    %c0_0 = arith.constant 0 : index
    %0 = vector.load %arg2[%c0, %c0_0] : memref<8x24xf32, #tpu.memory_space<vmem>>, vector<8x24xf32>
    %c0_1 = arith.constant 0 : index
    %c0_2 = arith.constant 0 : index
    %1 = vector.load %arg3[%c0_1, %c0_2] : memref<8x1xf32, #tpu.memory_space<vmem>>, vector<8x1xf32>
    %c0_3 = arith.constant 0 : index
    %c0_4 = arith.constant 0 : index
    %c0_5 = arith.constant 0 : index
    %2 = vector.load %arg1[%c0_3, %c0_4, %c0_5] : memref<1x4x16xf32, #tpu.memory_space<vmem>>, vector<1x4x16xf32>
    %cst = arith.constant dense<0.000000e+00> : vector<1x4xf32>
    %3 = vector.multi_reduction <add>, %2, %cst [2] : vector<1x4x16xf32> to vector<1x4xf32>
    %4 = vector.shape_cast %3 : vector<1x4xf32> to vector<1x4x1xf32>
    %cst_6 = arith.constant dense<0.000000e+00> : vector<1x1xf32>
    %5 = vector.multi_reduction <add>, %4, %cst_6 [1] : vector<1x4x1xf32> to vector<1x1xf32>
    %6 = vector.shape_cast %5 : vector<1x1xf32> to vector<1x1x1xf32>
    %cst_7 = arith.constant 1.562500e-02 : f32
    %7 = vector.broadcast %cst_7 : f32 to vector<1x1x1xf32>
    %8 = arith.mulf %6, %7 : vector<1x1x1xf32>
    %9 = vector.broadcast %8 : vector<1x1x1xf32> to vector<1x4x16xf32>
    %10 = arith.subf %2, %9 : vector<1x4x16xf32>
    %11 = arith.mulf %10, %10 : vector<1x4x16xf32>
    %cst_8 = arith.constant dense<0.000000e+00> : vector<1x4xf32>
    %12 = vector.multi_reduction <add>, %11, %cst_8 [2] : vector<1x4x16xf32> to vector<1x4xf32>
    %13 = vector.shape_cast %12 : vector<1x4xf32> to vector<1x4x1xf32>
    %cst_9 = arith.constant dense<0.000000e+00> : vector<1x1xf32>
    %14 = vector.multi_reduction <add>, %13, %cst_9 [1] : vector<1x4x1xf32> to vector<1x1xf32>
    %15 = vector.shape_cast %14 : vector<1x1xf32> to vector<1x1x1xf32>
    %cst_10 = arith.constant 1.562500e-02 : f32
    %16 = vector.broadcast %cst_10 : f32 to vector<1x1x1xf32>
    %17 = arith.mulf %15, %16 : vector<1x1x1xf32>
    %cst_11 = arith.constant 9.99999993E-9 : f32
    %18 = vector.broadcast %cst_11 : f32 to vector<1x1x1xf32>
    %19 = arith.addf %17, %18 : vector<1x1x1xf32>
    %20 = math.rsqrt %19 : vector<1x1x1xf32>
    %21 = vector.broadcast %20 : vector<1x1x1xf32> to vector<1x4x16xf32>
    %22 = arith.mulf %10, %21 : vector<1x4x16xf32>
    %cst_12 = arith.constant 0.000000e+00 : f32
    %23 = vector.broadcast %cst_12 : f32 to vector<1x4x16xf32>
    %24 = tpu.concatenate %22, %23 in 1 : vector<1x4x16xf32>, vector<1x4x16xf32> -> vector<1x8x16xf32>
    %25 = vector.shape_cast %24 : vector<1x8x16xf32> to vector<8x16xf32>
    %26 = vector.extract_strided_slice %25 {offsets = [0, 1], sizes = [8, 15], strides = [1, 1]} : vector<8x16xf32> to vector<8x15xf32>
    %cst_13 = arith.constant 0.000000e+00 : f32
    %27 = vector.broadcast %cst_13 : f32 to vector<8x1xf32>
    %28 = tpu.concatenate %26, %27 in 1 : vector<8x15xf32>, vector<8x1xf32> -> vector<8x16xf32>
    %29 = vector.extract_strided_slice %25 {offsets = [0, 2], sizes = [8, 14], strides = [1, 1]} : vector<8x16xf32> to vector<8x14xf32>
    %cst_14 = arith.constant 0.000000e+00 : f32
    %30 = vector.broadcast %cst_14 : f32 to vector<8x2xf32>
    %31 = tpu.concatenate %29, %30 in 1 : vector<8x14xf32>, vector<8x2xf32> -> vector<8x16xf32>
    %32 = tpu.concatenate %25, %28, %31 in 0 : vector<8x16xf32>, vector<8x16xf32>, vector<8x16xf32> -> vector<24x16xf32>
    %cst_15 = arith.constant dense<0.000000e+00> : vector<8x16xf32>
    %33 = tpu.matmul %0, %32, %cst_15 {dimension_numbers = #tpu.dot_dimension_numbers<[1], [0], [0], [1], [0, 0, 1, 1], [], []>} : vector<8x24xf32>, vector<24x16xf32>, vector<8x16xf32> -> vector<8x16xf32>
    %34 = vector.broadcast %1 : vector<8x1xf32> to vector<8x16xf32>
    %35 = arith.addf %33, %34 : vector<8x16xf32>
    %36 = vector.extract_strided_slice %35 {offsets = [0, 0], sizes = [8, 14], strides = [1, 1]} : vector<8x16xf32> to vector<8x14xf32>
    %c0_16 = arith.constant 0 : index
    %c0_17 = arith.constant 0 : index
    %c0_18 = arith.constant 0 : index
    %37 = vector.load %arg4[%c0_16, %c0_17, %c0_18] : memref<1x8x14xf32, #tpu.memory_space<vmem>>, vector<1x8x14xf32>
    %38 = vector.shape_cast %37 : vector<1x8x14xf32> to vector<8x14xf32>
    %39 = vector.shape_cast %36 : vector<8x14xf32> to vector<1x8x14xf32>
    tpu.vector_store %arg4[%c0_16, %c0_17, %c0_18], %39 {strides = array<i32>} : memref<1x8x14xf32, #tpu.memory_space<vmem>>, vector<1x8x14xf32>,
    return
  }
  func.func @transform_0(%arg0: i32) -> (i32, i32, i32) {
    %c0_i32 = arith.constant 0 : i32
    %c0_i32_0 = arith.constant 0 : i32
    %c0_i32_1 = arith.constant 0 : i32
    return %arg0, %c0_i32, %c0_i32_0 : i32, i32, i32
  }
  func.func @transform_1(%arg0: i32) -> (i32, i32) {
    %c0_i32 = arith.constant 0 : i32
    %c0_i32_0 = arith.constant 0 : i32
    %c0_i32_1 = arith.constant 0 : i32
    return %c0_i32, %c0_i32_0 : i32, i32
  }
  func.func @transform_2(%arg0: i32) -> (i32, i32) {
    %c0_i32 = arith.constant 0 : i32
    %c0_i32_0 = arith.constant 0 : i32
    %c0_i32_1 = arith.constant 0 : i32
    return %c0_i32, %c0_i32_0 : i32, i32
  }
  func.func @transform_3(%arg0: i32) -> (i32, i32, i32) {
    %c0_i32 = arith.constant 0 : i32
    %c0_i32_0 = arith.constant 0 : i32
    %c0_i32_1 = arith.constant 0 : i32
    return %arg0, %c0_i32, %c0_i32_0 : i32, i32, i32
  }
}

</mosaic_0001>

<llo_original>
// kernel: tpu_custom_call.1
$region0: #{tpu_custom_call.1}
  #allocation0 [shape = 'u32[]', space=smem, size = 0x4, offset = 0x4, fixed_abs, tag = 'smem constant byte address 0x4 - core index']
  #allocation1 [shape = 'u32[144,128]{1,0:T(1,128)}', space=vmem, size = 0x12000, scoped, tag = 'internal scratch']
  %s0 = inlined_call_operand.hbm [shape: f32[2,4,16], index: 0, kind: input, shape index: {}]
  %s1 = inlined_call_operand.hbm [shape: f32[8,24], index: 1, kind: input, shape index: {}]
  %s2 = inlined_call_operand.hbm [shape: f32[8,1], index: 2, kind: input, shape index: {}]
  %s3 = inlined_call_operand.hbm [shape: f32[2,8,14], index: 3, kind: output, shape index: {}]
  %s4 = sld [smem:[#allocation0]]
  $region57: #{tpu_custom_call.1} parent=0
    _
  %s6 = ssub.s32 1, %s4
  %s7 = scalar_select 0, %s6, %s4
  $region1: #{tpu_custom_call.1} parent=0
    #allocation2 [shape = 'u8[4096]{0}', space=vmem, size = 0x1000, scoped, tag = 'input window, operand 0']
    #allocation3 [shape = 's32[2]{0}', space=sflag, size = 0x8, scoped, tag = 'scoped memory for tpu_custom_call.1']
    #allocation4 [shape = 's32[2]{0}', space=sflag, size = 0x8, scoped, tag = 'scoped memory for tpu_custom_call.1']
    #allocation5 [shape = 'u8[4096]{0}', space=vmem, size = 0x1000, scoped, tag = 'input window, operand 1, single buffered']
    #allocation6 [shape = 's32[1]{0}', space=sflag, size = 0x4, scoped, tag = 'scoped memory for tpu_custom_call.1']
    #allocation7 [shape = 'u8[4096]{0}', space=vmem, size = 0x1000, scoped, tag = 'input window, operand 2, single buffered']
    #allocation8 [shape = 'u8[8192]{0}', space=vmem, size = 0x2000, scoped, tag = 'output window, operand 0']
    %8 = vsyncpa [#allocation3], 0
    %s9 = scalar_lea.sflag [#allocation3], 1
    %10 = vsyncpa %s9, 0
    %11 = vsyncpa [#allocation6], 0
    %12 = vsyncpa [#allocation4], 0
    %s13 = scalar_lea.sflag [#allocation4], 1
    %14 = vsyncpa %s13, 0
    loop: start=0, step=1, limit=4
    $region2: #{tpu_custom_call.1} parent=1 // loop_pre_header
      _
    $region3: #{tpu_custom_call.1} parent=1 // loop_header
      %s16 = sphi 0, %s20
      %p17 = scmp.ge.s32.totalorder %s16, 4
      %s26 = sphi 0, %s28
      %s29 = sphi 0, %s26
      %s30 = sphi 0, %s29
      %s46 = sphi 0, %s30
      %s50 = sphi 0, %s50
      %s52 = sphi 0, %s50
      %s53 = sphi 0, %s52
      %s67 = sphi 0, %s53
      %s71 = sphi 0, %s71
      %s73 = sphi 0, %s71
      %s74 = sphi 0, %s73
      %s88 = sphi 0, %s74
      %s94 = sphi 0, %s96
      %s97 = sphi 0, %s94
      %s98 = sphi 0, %s97
      %s114 = sphi 0, %s98
    $region4: #{tpu_custom_call.1} parent=1 // loop_header_branch
      %19 = sbr.rel (%p17) target = $region8
    $region5: #{tpu_custom_call.1} parent=1 // loop_body
      %s21 = ssub.s32 %s16, 1
      %s22 = ssub.s32 %s16, 2
      %s23 = sadd.s32 %s16, 1
      %s24 = ssub.s32 %s16, %s23
      %p25 = scmp.eq.s32.totalorder %s24, 0
      %s27 = sadd.s32 %s26, 1
      %s28 = scalar_select %p25, %s26, %s27
      %p31 = pneg %p25
      %p32 = scmp.eq.s32.totalorder %s16, 1
      %p33 = por %p31, %p32
      %p34 = scmp.ne.s32.totalorder %s26, %s29
      %p35 = scmp.eq.s32.totalorder %s16, 0
      %p36 = por %p34, %p35
      %p37 = scmp.ne.s32.totalorder %s26, %s29
      %p38 = scmp.eq.s32.totalorder %s21, 1
      %p39 = por %p37, %p38
      %p40 = scmp.ne.s32.totalorder %s29, %s30
      %p41 = scmp.eq.s32.totalorder %s21, 0
      %p42 = por %p40, %p41
      %p43 = scmp.ne.s32.totalorder %s29, %s30
      %p44 = scmp.eq.s32.totalorder %s22, 1
      %p45 = por %p43, %p44
      %p47 = scmp.ne.s32.totalorder %s30, %s46
      %p48 = scmp.eq.s32.totalorder %s22, 0
      %p49 = por %p47, %p48
      %s51 = sadd.s32 %s50, 1
      %p54 = scmp.eq.s32.totalorder %s16, 1
      %p55 = scmp.ne.s32.totalorder %s50, %s52
      %p56 = scmp.eq.s32.totalorder %s16, 0
      %p57 = por %p55, %p56
      %p58 = scmp.ne.s32.totalorder %s50, %s52
      %p59 = scmp.eq.s32.totalorder %s21, 1
      %p60 = por %p58, %p59
      %p61 = scmp.ne.s32.totalorder %s52, %s53
      %p62 = scmp.eq.s32.totalorder %s21, 0
      %p63 = por %p61, %p62
      %p64 = scmp.ne.s32.totalorder %s52, %s53
      %p65 = scmp.eq.s32.totalorder %s22, 1
      %p66 = por %p64, %p65
      %p68 = scmp.ne.s32.totalorder %s53, %s67
      %p69 = scmp.eq.s32.totalorder %s22, 0
      %p70 = por %p68, %p69
      %s72 = sadd.s32 %s71, 1
      %p75 = scmp.eq.s32.totalorder %s16, 1
      %p76 = scmp.ne.s32.totalorder %s71, %s73
      %p77 = scmp.eq.s32.totalorder %s16, 0
      %p78 = por %p76, %p77
      %p79 = scmp.ne.s32.totalorder %s71, %s73
      %p80 = scmp.eq.s32.totalorder %s21, 1
      %p81 = por %p79, %p80
      %p82 = scmp.ne.s32.totalorder %s73, %s74
      %p83 = scmp.eq.s32.totalorder %s21, 0
      %p84 = por %p82, %p83
      %p85 = scmp.ne.s32.totalorder %s73, %s74
      %p86 = scmp.eq.s32.totalorder %s22, 1
      %p87 = por %p85, %p86
      %p89 = scmp.ne.s32.totalorder %s74, %s88
      %p90 = scmp.eq.s32.totalorder %s22, 0
      %p91 = por %p89, %p90
      %s92 = ssub.s32 %s16, %s23
      %p93 = scmp.eq.s32.totalorder %s92, 0
      %s95 = sadd.s32 %s94, 1
      %s96 = scalar_select %p93, %s94, %s95
      %p99 = pneg %p93
      %p100 = scmp.eq.s32.totalorder %s16, 1
      %p101 = por %p99, %p100
      %p102 = scmp.ne.s32.totalorder %s94, %s97
      %p103 = scmp.eq.s32.totalorder %s16, 0
      %p104 = por %p102, %p103
      %p105 = scmp.ne.s32.totalorder %s94, %s97
      %p106 = scmp.eq.s32.totalorder %s21, 1
      %p107 = por %p105, %p106
      %p108 = scmp.ne.s32.totalorder %s97, %s98
      %p109 = scmp.eq.s32.totalorder %s21, 0
      %p110 = por %p108, %p109
      %p111 = scmp.ne.s32.totalorder %s97, %s98
      %p112 = scmp.eq.s32.totalorder %s22, 1
      %p113 = por %p111, %p112
      %p115 = scmp.ne.s32.totalorder %s98, %s114
      %p116 = scmp.eq.s32.totalorder %s22, 0
      %p117 = por %p115, %p116
      %p118 = scmp.le.s32.totalorder 1, %s16
      %p119 = scmp.lt.s32.totalorder %s16, 3
      %p120 = pnand %p118, %p119
      %p121 = pneg %p120
      // Predicated region
      $region9: #{tpu_custom_call.1} parent=5 // pred_check
        _
      $region10: #{tpu_custom_call.1} parent=5 // pred_check_branch
        %123 = sbr.rel (%p120) target = $region12
      $region11: #{tpu_custom_call.1} parent=5 // pred_region
        %s124 = ssub.s32 %s16, 1
        // Predicated region
        $region13: #{tpu_custom_call.1} parent=11 // pred_check
          %p125 = pneg %p63
        $region14: #{tpu_custom_call.1} parent=11 // pred_check_branch
          %127 = sbr.rel (%p125) target = $region16
        $region15: #{tpu_custom_call.1} parent=11 // pred_region
          %s129 = ssub.s32 128, 128
          %130 = vsyncadd [#allocation6], %s129
          %s132 = sshll.u32 [#allocation5], 4
          %s133 = int_to_ptr.vmem [resolvable:$true] %s132
          %135 = dma.hbm_to_vmem [thread:$0]  %s1, 128, %s133, [#allocation6]
        $region16: #{tpu_custom_call.1} parent=11 // pred_fallthru
          _
        // Predicated region
        $region17: #{tpu_custom_call.1} parent=11 // pred_check
          %p136 = pneg %p84
        $region18: #{tpu_custom_call.1} parent=11 // pred_check_branch
          %138 = sbr.rel (%p136) target = $region20
        $region19: #{tpu_custom_call.1} parent=11 // pred_region
          %s140 = ssub.s32 128, 128
          %141 = vsyncadd [#allocation6], %s140
          %s143 = sshll.u32 [#allocation7], 4
          %s144 = int_to_ptr.vmem [resolvable:$true] %s143
          %146 = dma.hbm_to_vmem [thread:$0]  %s2, 128, %s144, [#allocation6]
        $region20: #{tpu_custom_call.1} parent=11 // pred_fallthru
          _
      $region12: #{tpu_custom_call.1} parent=5 // pred_fallthru
        _
      %p147 = scmp.lt.s32.totalorder %s16, 2
      // Predicated region
      $region21: #{tpu_custom_call.1} parent=5 // pred_check
        %p148 = pneg %p147
      $region22: #{tpu_custom_call.1} parent=5 // pred_check_branch
        %150 = sbr.rel (%p148) target = $region24
      $region23: #{tpu_custom_call.1} parent=5 // pred_region
        // Predicated region
        $region25: #{tpu_custom_call.1} parent=23 // pred_check
          %p151 = pneg %p36
        $region26: #{tpu_custom_call.1} parent=23 // pred_check_branch
          %153 = sbr.rel (%p151) target = $region28
        $region27: #{tpu_custom_call.1} parent=23 // pred_region
          %s154 = sand.u32 %s26, 1
          %s155 = scalar_lea.sflag [#allocation3], %s154
          %s156 = sand.u32 %s26, 1
          %s157 = smul.addr %s156, 4
          %s158 = scalar_lea.vmem [#allocation2], %s157
          %s160 = ssub.s32 64, 64
          %161 = vsyncadd %s155, %s160
          %s162 = smul.addr %s16, 64
          %s163 = scalar_lea.hbm %s0, %s162
          %s165 = sshll.u32 %s158, 4
          %s166 = int_to_ptr.vmem [resolvable:$true] %s165
          %168 = dma.hbm_to_vmem [thread:$0]  %s163, 64, %s166, %s155
        $region28: #{tpu_custom_call.1} parent=23 // pred_fallthru
          _
      $region24: #{tpu_custom_call.1} parent=5 // pred_fallthru
        _
      %p169 = scmp.le.s32.totalorder 1, %s16
      %p170 = scmp.lt.s32.totalorder %s16, 3
      %p171 = pnand %p169, %p170
      %p172 = pneg %p171
      // Predicated region
      $region29: #{tpu_custom_call.1} parent=5 // pred_check
        _
      $region30: #{tpu_custom_call.1} parent=5 // pred_check_branch
        %174 = sbr.rel (%p171) target = $region32
      $region31: #{tpu_custom_call.1} parent=5 // pred_region
        %s175 = ssub.s32 %s16, 1
        %s176 = sand.u32 %s29, 1
        %s177 = scalar_lea.sflag [#allocation3], %s176
        %s178 = sand.u32 %s29, 1
        %s179 = smul.addr %s178, 4
        %s180 = scalar_lea.vmem [#allocation2], %s179
        // Predicated region
        $region33: #{tpu_custom_call.1} parent=31 // pred_check
          %p181 = pneg %p42
        $region34: #{tpu_custom_call.1} parent=31 // pred_check_branch
          %183 = sbr.rel (%p181) target = $region36
        $region35: #{tpu_custom_call.1} parent=31 // pred_region
          %184 = dma.done %s177, 64
        $region36: #{tpu_custom_call.1} parent=31 // pred_fallthru
          _
        // Predicated region
        $region37: #{tpu_custom_call.1} parent=31 // pred_check
          %p185 = pneg %p63
        $region38: #{tpu_custom_call.1} parent=31 // pred_check_branch
          %187 = sbr.rel (%p185) target = $region40
        $region39: #{tpu_custom_call.1} parent=31 // pred_region
          %188 = dma.done [#allocation6], 128
        $region40: #{tpu_custom_call.1} parent=31 // pred_fallthru
          _
        // Predicated region
        $region41: #{tpu_custom_call.1} parent=31 // pred_check
          %p189 = pneg %p84
        $region42: #{tpu_custom_call.1} parent=31 // pred_check_branch
          %191 = sbr.rel (%p189) target = $region44
        $region43: #{tpu_custom_call.1} parent=31 // pred_region
          %192 = dma.done [#allocation6], 128
        $region44: #{tpu_custom_call.1} parent=31 // pred_fallthru
          _
        %s193 = sand.u32 %s29, 1
        %s194 = scalar_lea.sflag [#allocation3], %s193
        %s195 = sand.u32 %s29, 1
        %s196 = smul.addr %s195, 4
        %s197 = scalar_lea.vmem [#allocation2], %s196
        %p198 = pneg %p42
        %p199 = pneg %p39
        %p200 = pneg %p63
        %p201 = pneg %p60
        %p202 = pneg %p84
        %p203 = pneg %p81
        %p204 = pneg %p110
        %p205 = pneg %p107
        %s206 = sand.u32 %s97, 1
        %s207 = scalar_lea.sflag [#allocation4], %s206
        %s208 = sand.u32 %s97, 1
        %s209 = smul.addr %s208, 8
        %s210 = scalar_lea.vmem [#allocation8], %s209
        %v211 = vld [vmem:[#allocation5] sm:$0xff]
        %v212 = vld [vmem:[#allocation7] sm:$0xff]
        %v213 = vld [vmem:[%s180] sm:$0xf]
        %vm214 = vcmask 125952
        %v215 = vsel %vm214, %v213, 0.0
        %216 = vadd.xlane.f32.xlu0 %v215
        %v217 = vpop.xlane.xlu0 %216
        %vm218 = vcmask 1043456
        %v219 = vsel %vm218, %v217, 0.0
        %v220 = vrot.slane %v219, 4
        %v221 = vadd.f32 %v219, %v220
        %v222 = vrot.slane %v221, 2
        %v223 = vadd.f32 %v221, %v222
        %v224 = vrot.slane %v223, 1
        %v225 = vadd.f32 %v223, %v224
        %v226 = vmul.f32 %v225, 0.015625
        %v227 = vsub.f32 %v213, %v226
        %v228 = vmul.f32 %v227, %v227
        %v229 = vsel %vm214, %v228, 0.0
        %230 = vadd.xlane.f32.xlu0 %v229
        %v231 = vpop.xlane.xlu0 %230
        %v232 = vsel %vm218, %v231, 0.0
        %v233 = vrot.slane %v232, 4
        %v234 = vadd.f32 %v232, %v233
        %v235 = vrot.slane %v234, 2
        %v236 = vadd.f32 %v234, %v235
        %v237 = vrot.slane %v236, 1
        %v238 = vadd.f32 %v236, %v237
        %v239 = vmul.f32 %v238, 0.015625
        %v240 = vadd.f32 %v239, 1e-08
        %v241 = vrsqrt.pop %v240
        %v242 = vmul.f32 %v227, %v241
        %v243 = vsel %vm218, %v242, 0.0
        %245 = vrot.lane.b32.xlu0 %v243, 127
        %v246 = vpop.permute.xlu0 %245
        %vm248 = vcmask 121856
        %v249 = vsel %vm248, %v246, 0.0
        %250 = vrot.lane.b32.xlu0 %v243, 126
        %v251 = vpop.permute.xlu0 %250
        %vm253 = vcmask 113664
        %v254 = vsel %vm253, %v251, 0.0
        %256 = vset.pattern.permute.xlu0 0
        %257 = vperm.xlu0 %256, %v212
        %v258 = vpop.permute.xlu0 %257
        %vm260 = vcmask 195584
        %v262 = vsel %vm260, %v211, 0
        %264 = vmatprep.subr.mxu0 0.0
        %265 = vmatpush1.msra.mxu0 %v243
        %266 = vmatprep.subr.mxu0 0.0
        %267 = vmatpush1.msra.mxu0 %v249
        %268 = vmatprep.subr.mxu0 0.0
        %269 = vmatpush1.msra.mxu0 %v254
        %270 = vmatprep.subr.mxu0 0.0
        %271 = vmatpush1.msra.mxu0 0.0
        %272 = vmatprep.subr.mxu0 0.0
        %273 = vmatpush1.msra.mxu0 0.0
        %274 = vmatprep.subr.mxu0 0.0
        %275 = vmatpush1.msra.mxu0 0.0
        %276 = vmatprep.subr.mxu0 0.0
        %277 = vmatpush1.msra.mxu0 0.0
        %278 = vmatprep.subr.mxu0 0.0
        %279 = vmatpush1.msra.mxu0 0.0
        %280 = vmatprep.subr.mxu0 0.0
        %281 = vmatpush1.msra.mxu0 0.0
        %282 = vmatprep.subr.mxu0 0.0
        %283 = vmatpush1.msra.mxu0 0.0
        %284 = vmatprep.subr.mxu0 0.0
        %285 = vmatpush1.msra.mxu0 0.0
        %286 = vmatprep.subr.mxu0 0.0
        %287 = vmatpush1.msra.mxu0 0.0
        %288 = vmatprep.subr.mxu0 0.0
        %289 = vmatpush1.msra.mxu0 0.0
        %290 = vmatprep.subr.mxu0 0.0
        %291 = vmatpush1.msra.mxu0 0.0
        %292 = vmatprep.subr.mxu0 0.0
        %293 = vmatpush1.msra.mxu0 0.0
        %294 = vmatprep.subr.mxu0 0.0
        %295 = vmatpush1.msra.mxu0 0.0
        %296 = vmatprep.subr.mxu0 0.0
        %297 = vmatpush1.msra.mxu0 0.0
        %298 = vmatprep.subr.mxu0 0.0
        %299 = vmatpush1.msra.mxu0 0.0
        %300 = vmatprep.subr.mxu0 0.0
        %301 = vmatpush1.msra.mxu0 0.0
        %302 = vmatprep.subr.mxu0 0.0
        %303 = vmatpush1.msra.mxu0 0.0
        %304 = vmatprep.subr.mxu0 0.0
        %305 = vmatpush1.msra.mxu0 0.0
        %306 = vmatprep.subr.mxu0 0.0
        %307 = vmatpush1.msra.mxu0 0.0
        %308 = vmatprep.subr.mxu0 0.0
        %309 = vmatpush1.msra.mxu0 0.0
        %310 = vmatprep.subr.mxu0 0.0
        %311 = vmatpush1.msra.mxu0 0.0
        %312 = vmatprep.subr.mxu0 0.0
        %313 = vmatpush1.msra.mxu0 0.0
        %314 = vmatprep.subr.mxu0 0.0
        %315 = vmatpush1.msra.mxu0 0.0
        %316 = vmatprep.subr.mxu0 0.0
        %317 = vmatpush1.msra.mxu0 0.0
        %318 = vmatprep.subr.mxu0 0.0
        %319 = vmatpush1.msra.mxu0 0.0
        %320 = vmatprep.subr.mxu0 0.0
        %321 = vmatpush1.msra.mxu0 0.0
        %322 = vmatprep.subr.mxu0 0.0
        %323 = vmatpush1.msra.mxu0 0.0
        %324 = vmatprep.subr.mxu0 0.0
        %325 = vmatpush1.msra.mxu0 0.0
        %326 = vmatprep.subr.mxu0 0.0
        %327 = vmatpush1.msra.mxu0 0.0
        %328 = vmatprep.mubr.f32.mxu0 0.0
        %329 = vmatmul.mubr.f32.gmra.mrb[0].mxu0 %v262
        %v330 = vpop.f32.mrb[0].mxu0
        %v331 = vadd.f32 %v258, %v330
        %v332 = vpop.f32.mrb[0].mxu0
        %333 = vdwg.mxu0
        %334 = vst.msk [vmem:[%s210] sm:$0xff] %vm253, %v331
        %s335 = sand.u32 %s97, 1
        %s336 = scalar_lea.sflag [#allocation4], %s335
        %s337 = sand.u32 %s97, 1
        %s338 = smul.addr %s337, 8
        %s339 = scalar_lea.vmem [#allocation8], %s338
        // Predicated region
        $region45: #{tpu_custom_call.1} parent=31 // pred_check
          %p340 = pneg %p107
        $region46: #{tpu_custom_call.1} parent=31 // pred_check_branch
          %342 = sbr.rel (%p340) target = $region48
        $region47: #{tpu_custom_call.1} parent=31 // pred_region
          %s344 = ssub.s32 128, 128
          %345 = vsyncadd %s336, %s344
          %s346 = smul.addr %s21, 128
          %s347 = scalar_lea.hbm %s3, %s346
          %s349 = sshll.u32 %s339, 4
          %s350 = int_to_ptr.vmem [resolvable:$true] %s349
          %352 = dma.vmem_to_hbm [thread:$0]  %s350, 128, %s347, %s336
        $region48: #{tpu_custom_call.1} parent=31 // pred_fallthru
          _
      $region32: #{tpu_custom_call.1} parent=5 // pred_fallthru
        _
      %p353 = scmp.le.s32.totalorder 2, %s16
      // Predicated region
      $region49: #{tpu_custom_call.1} parent=5 // pred_check
        %p354 = pneg %p353
      $region50: #{tpu_custom_call.1} parent=5 // pred_check_branch
        %356 = sbr.rel (%p354) target = $region52
      $region51: #{tpu_custom_call.1} parent=5 // pred_region
        %s357 = ssub.s32 %s16, 2
        // Predicated region
        $region53: #{tpu_custom_call.1} parent=51 // pred_check
          %p358 = pneg %p113
        $region54: #{tpu_custom_call.1} parent=51 // pred_check_branch
          %360 = sbr.rel (%p358) target = $region56
        $region55: #{tpu_custom_call.1} parent=51 // pred_region
          %s361 = sand.u32 %s98, 1
          %s362 = scalar_lea.sflag [#allocation4], %s361
          %s363 = sand.u32 %s98, 1
          %s364 = smul.addr %s363, 8
          %s365 = scalar_lea.vmem [#allocation8], %s364
          %366 = dma.done %s362, 128
        $region56: #{tpu_custom_call.1} parent=51 // pred_fallthru
          _
      $region52: #{tpu_custom_call.1} parent=5 // pred_fallthru
        _
    $region6: #{tpu_custom_call.1} parent=1 // loop_footer
      %s20 = sadd.s32 1, %s16
    $region7: #{tpu_custom_call.1} parent=1 // loop_footer_branch
      %15 = sbr.rel target = $region3
    $region8: #{tpu_custom_call.1} parent=1 // loop_exit
      _
    %367 = vsyncpa [#allocation3], 1
    %s368 = scalar_lea.sflag [#allocation3], 1
    %369 = vsyncpa %s368, 1
    %370 = vsyncpa [#allocation6], 1
    %371 = vsyncpa [#allocation4], 1
    %s372 = scalar_lea.sflag [#allocation4], 1
    %373 = vsyncpa %s372, 1

</llo_original>
